<compile_context>
chip_gen: v6e
topology: v6e:2x2x1
jax: 0.10.0
libtpu: 0.0.40
codegen_flags: <defaults>
</compile_context>

<pallas_src>
import functools

import jax
import jax.numpy as jnp
from jax.experimental import pallas as pl
from jax.experimental.pallas import tpu as pltpu

EPS = 1e-8


def _normalizer_kernel(count_ref, mean_ref, var_ref, data_ref, *out_refs,
                       training, normalize_function, batch_size):
    """One feature tile: (optional) running-stat update + normalization."""
    compute_out = normalize_function != 'identity'
    refs = list(out_refs)
    out_ref = refs.pop(0) if compute_out else None
    if training:
        new_mean_ref, new_var_ref = refs

    data = data_ref[...]          # (B, TD) float32
    old_mean = mean_ref[...]      # (1, TD)
    old_var = var_ref[...]        # (1, TD)

    if training:
        # RunningMeanStd.update (parallel/Welford merge with batch stats).
        count = count_ref[0].astype(jnp.float32)
        bsz = float(batch_size)
        batch_mean = jnp.mean(data, axis=0, keepdims=True)
        diff = data - batch_mean
        # torch.var default is unbiased (divide by B-1).
        batch_var = jnp.sum(diff * diff, axis=0, keepdims=True) / (bsz - 1.0)
        total = count + bsz
        delta = batch_mean - old_mean
        new_mean = old_mean + delta * (bsz / total)
        m2 = (old_var * count + batch_var * bsz
              + delta * delta * (count * bsz / total))
        new_var = m2 / total
        new_mean_ref[...] = new_mean
        new_var_ref[...] = new_var
    else:
        new_mean = old_mean
        new_var = old_var

    if not compute_out:
        return

    # Normalize with the just-updated buffers (as torch's forward does).
    # Reciprocal is hoisted to the (1, TD) row: one EUP op per column instead
    # of one per element; the B×TD hot path is pure VPU sub/mul.
    if normalize_function == 'affine':
        inv = 1.0 / (jnp.sqrt(new_var) + EPS)
        out_ref[...] = (data - new_mean) * inv
    elif normalize_function == 'scale':
        inv = 1.0 / (jnp.sqrt(new_var) + EPS)
        out_ref[...] = data * inv
    elif normalize_function == 'translate':
        out_ref[...] = data - new_mean
    else:
        raise ValueError(normalize_function)


def _round_up(x, m):
    return ((x + m - 1) // m) * m


def _choose_block_d(B, D, *, vmem_tile_budget_bytes=24 << 20, num_cores_hint=2):
    """Pick the widest lane-dense feature tile that fits the VMEM budget.

    Live footprint ~= double-buffered (B, block_d) input + output tiles
    (mean/var tiles are negligible): ~16 * B * block_d bytes of f32.
    Budgeted at 24 MiB so it stays under the 32 MiB scoped limit and leaves
    headroom on v7x's 64 MiB VMEM.
    """
    d_full = _round_up(D, 128)
    max_by_vmem = max(128, (vmem_tile_budget_bytes // (16 * B)) // 128 * 128)
    block_d = min(d_full, max_by_vmem, 2048)
    # Keep >= 2 feature tiles so the 'parallel' axis can shard across the two
    # TensorCores on v7x (harmless on single-TC v5e/v6e). Never go below 128.
    if num_cores_hint > 1 and d_full > 128 and pl.cdiv(D, block_d) < num_cores_hint:
        block_d = max(128, _round_up(pl.cdiv(D, num_cores_hint), 128))
    return block_d


def normalizer_forward(data, mean, var, count, *,
                       normalize_function='affine', training=True,
                       block_d=None, donate_data=False,
                       vmem_limit_bytes=32 << 20):
    """JAX/Pallas equivalent of Normalizer.forward (RunningMeanStd).

    Args:
      data:  (B, D) float32
      mean:  (D,)   float32  buffer
      var:   (D,)   float32  buffer
      count: (1,)   int      buffer
    Returns:
      out (B, D), new_mean (D,), new_var (D,), new_count (1,)
    """
    B, D = data.shape
    new_count = count + B if training else count

    # Identity + eval: nothing to compute, nothing to DMA.
    if normalize_function == 'identity' and not training:
        return data, mean, var, new_count

    if block_d is None:
        block_d = _choose_block_d(B, D)

    mean2 = mean.reshape(1, D)
    var2 = var.reshape(1, D)
    count_i32 = count.astype(jnp.int32)

    compute_out = normalize_function != 'identity'
    grid = (pl.cdiv(D, block_d),)

    out_shapes = []
    out_specs = []
    if compute_out:
        out_shapes.append(jax.ShapeDtypeStruct((B, D), data.dtype))
        out_specs.append(pl.BlockSpec((B, block_d), lambda j, c: (0, j)))
    if training:
        out_shapes.append(jax.ShapeDtypeStruct((1, D), jnp.float32))
        out_specs.append(pl.BlockSpec((1, block_d), lambda j, c: (0, j)))
        out_shapes.append(jax.ShapeDtypeStruct((1, D), jnp.float32))
        out_specs.append(pl.BlockSpec((1, block_d), lambda j, c: (0, j)))

    kernel = functools.partial(
        _normalizer_kernel,
        training=training,
        normalize_function=normalize_function,
        batch_size=B,
    )

    # Optional: alias `data` onto the normalized output to avoid a second B×D
    # HBM allocation when the caller does not need the raw input.
    # pallas_call inputs are (count, mean, var, data) -> data is index 3.
    io_alias = {3: 0} if (donate_data and compute_out) else {}

    results = pl.pallas_call(
        kernel,
        out_shape=tuple(out_shapes),
        grid_spec=pltpu.PrefetchScalarGridSpec(
            num_scalar_prefetch=1,                 # `count` lands in SMEM
            grid=grid,
            in_specs=[
                pl.BlockSpec((1, block_d), lambda j, c: (0, j)),   # mean
                pl.BlockSpec((1, block_d), lambda j, c: (0, j)),   # var
                pl.BlockSpec((B, block_d), lambda j, c: (0, j)),   # data
            ],
            out_specs=out_specs,
        ),
        compiler_params=pltpu.CompilerParams(
            dimension_semantics=("parallel",),
            vmem_limit_bytes=vmem_limit_bytes),
        input_output_aliases=io_alias,
    )(count_i32, mean2, var2, data)

    results = list(results)
    out = results.pop(0) if compute_out else data
    if training:
        new_mean = results.pop(0).reshape(D)
        new_var = results.pop(0).reshape(D)
    else:
        new_mean, new_var = mean, var
    return out, new_mean, new_var, new_count


def _ref_forward(data, mean, var, count, normalize_function, training):
    """Pure-JAX reference mirroring the PyTorch module."""
    if training:
        B = data.shape[0]
        batch_mean = data.mean(axis=0)
        batch_var = data.var(axis=0, ddof=1)
        cnt = count.astype(jnp.float32)
        total = cnt + B
        delta = batch_mean - mean
        new_mean = mean + delta * B / total
        m2 = var * cnt + batch_var * B + delta * delta * (cnt * B / total)
        new_var = m2 / total
        new_count = count + B
    else:
        new_mean, new_var, new_count = mean, var, count
    std = jnp.sqrt(new_var)
    if normalize_function == 'affine':
        out = (data - new_mean) / (std + EPS)
    elif normalize_function == 'scale':
        out = data / (std + EPS)
    elif normalize_function == 'translate':
        out = data - new_mean
    else:
        out = data
    return out, new_mean, new_var, new_count


if __name__ == "__main__":
    B, D = 8, 256

    key = jax.random.PRNGKey(0)
    data = jax.random.normal(key, (B, D), dtype=jnp.float32) * 3.0 + 1.5

    # Deterministic buffer init exactly as in Normalizer.__init__
    mean = jnp.zeros((D,), jnp.float32)
    var = jnp.ones((D,), jnp.float32)
    count = jnp.zeros((1,), jnp.int32)

    # --- Training-mode forward (update + affine normalize) — the hot path.
    out, new_mean, new_var, new_count = normalizer_forward(
        data, mean, var, count, normalize_function='affine', training=True)
    jax.block_until_ready((out, new_mean, new_var, new_count))

    r_out, r_mean, r_var, r_count = _ref_forward(
        data, mean, var, count, 'affine', True)
    assert jnp.allclose(out, r_out, atol=1e-5, rtol=1e-5)
    assert jnp.allclose(new_mean, r_mean, atol=1e-5, rtol=1e-5)
    assert jnp.allclose(new_var, r_var, atol=1e-5, rtol=1e-5)
    assert int(new_count[0]) == int(r_count[0])

    # --- Eval-mode forward on the updated buffers (normalize only, no
    # buffer outputs are produced/DMA'd back).
    out2, m2_, v2_, cnt2 = normalizer_forward(
        data, new_mean, new_var, new_count,
        normalize_function='affine', training=False)
    jax.block_until_ready(out2)
    r_out2, *_ = _ref_forward(data, new_mean, new_var, new_count,
                              'affine', False)
    assert jnp.allclose(out2, r_out2, atol=1e-5, rtol=1e-5)
    assert int(cnt2[0]) == int(new_count[0])

    # --- Identity + training: stats-only kernel path (no B×D output traffic).
    out3, m3, v3, c3 = normalizer_forward(
        data, mean, var, count, normalize_function='identity', training=True)
    jax.block_until_ready((out3, m3, v3))
    r_out3, r_m3, r_v3, r_c3 = _ref_forward(data, mean, var, count,
                                            'identity', True)
    assert jnp.allclose(out3, r_out3, atol=1e-5, rtol=1e-5)
    assert jnp.allclose(m3, r_m3, atol=1e-5, rtol=1e-5)
    assert jnp.allclose(v3, r_v3, atol=1e-5, rtol=1e-5)
    assert int(c3[0]) == int(r_c3[0])

    print("KERNEL_OK")
</pallas_src>

<mosaic_0001>
module attributes {stable_mosaic.version = 11 : i64} {
  func.func @_normalizer_kernel(%arg0: i32, %arg1: memref<1xi32, #tpu.memory_space<smem>>, %arg2: memref<1x128xf32, #tpu.memory_space<vmem>>, %arg3: memref<1x128xf32, #tpu.memory_space<vmem>>, %arg4: memref<8x128xf32, #tpu.memory_space<vmem>>, %arg5: memref<8x128xf32, #tpu.memory_space<vmem>>, %arg6: memref<1x128xf32, #tpu.memory_space<vmem>>, %arg7: memref<1x128xf32, #tpu.memory_space<vmem>>) attributes {dimension_semantics = [#tpu.dimension_semantics<parallel>], iteration_bounds = array<i64: 2>, scalar_prefetch = 1 : i64, scratch_operands = 0 : i64, tpu.core_type = #tpu.core_type<tc>, window_params = [{transform_indices = @transform_0, window_bounds = array<i64: 1, 128>}, {transform_indices = @transform_1, window_bounds = array<i64: 1, 128>}, {transform_indices = @transform_2, window_bounds = array<i64: 8, 128>}, {transform_indices = @transform_3, window_bounds = array<i64: 8, 128>}, {transform_indices = @transform_4, window_bounds = array<i64: 1, 128>}, {transform_indices = @transform_5, window_bounds = array<i64: 1, 128>}]} {
    %c0 = arith.constant 0 : index
    %c0_0 = arith.constant 0 : index
    %0 = vector.load %arg4[%c0, %c0_0] : memref<8x128xf32, #tpu.memory_space<vmem>>, vector<8x128xf32>
    %c0_1 = arith.constant 0 : index
    %c0_2 = arith.constant 0 : index
    %1 = vector.load %arg2[%c0_1, %c0_2] : memref<1x128xf32, #tpu.memory_space<vmem>>, vector<1x128xf32>
    %c0_3 = arith.constant 0 : index
    %c0_4 = arith.constant 0 : index
    %2 = vector.load %arg3[%c0_3, %c0_4] : memref<1x128xf32, #tpu.memory_space<vmem>>, vector<1x128xf32>
    %c0_5 = arith.constant 0 : index
    %3 = memref.load %arg1[%c0_5] : memref<1xi32, #tpu.memory_space<smem>>
    %4 = arith.sitofp %3 : i32 to f32
    %cst = arith.constant dense<0.000000e+00> : vector<128xf32>
    %5 = vector.multi_reduction <add>, %0, %cst [0] : vector<8x128xf32> to vector<128xf32>
    %6 = vector.shape_cast %5 : vector<128xf32> to vector<1x128xf32>
    %cst_6 = arith.constant 8.000000e+00 : f32
    %7 = vector.broadcast %cst_6 : f32 to vector<1x128xf32>
    %8 = arith.divf %6, %7 : vector<1x128xf32>
    %9 = vector.broadcast %8 : vector<1x128xf32> to vector<8x128xf32>
    %10 = arith.subf %0, %9 : vector<8x128xf32>
    %11 = arith.mulf %10, %10 : vector<8x128xf32>
    %cst_7 = arith.constant dense<0.000000e+00> : vector<128xf32>
    %12 = vector.multi_reduction <add>, %11, %cst_7 [0] : vector<8x128xf32> to vector<128xf32>
    %13 = vector.shape_cast %12 : vector<128xf32> to vector<1x128xf32>
    %cst_8 = arith.constant 7.000000e+00 : f32
    %14 = vector.broadcast %cst_8 : f32 to vector<1x128xf32>
    %15 = arith.divf %13, %14 : vector<1x128xf32>
    %cst_9 = arith.constant 8.000000e+00 : f32
    %16 = arith.addf %4, %cst_9 : f32
    %17 = arith.subf %8, %1 : vector<1x128xf32>
    %cst_10 = arith.constant 8.000000e+00 : f32
    %18 = arith.divf %cst_10, %16 : f32
    %19 = vector.broadcast %18 : f32 to vector<1x128xf32>
    %20 = arith.mulf %17, %19 : vector<1x128xf32>
    %21 = arith.addf %1, %20 : vector<1x128xf32>
    %22 = vector.broadcast %4 : f32 to vector<1x128xf32>
    %23 = arith.mulf %2, %22 : vector<1x128xf32>
    %cst_11 = arith.constant 8.000000e+00 : f32
    %24 = vector.broadcast %cst_11 : f32 to vector<1x128xf32>
    %25 = arith.mulf %15, %24 : vector<1x128xf32>
    %26 = arith.addf %23, %25 : vector<1x128xf32>
    %27 = arith.mulf %17, %17 : vector<1x128xf32>
    %cst_12 = arith.constant 8.000000e+00 : f32
    %28 = arith.mulf %4, %cst_12 : f32
    %29 = arith.divf %28, %16 : f32
    %30 = vector.broadcast %29 : f32 to vector<1x128xf32>
    %31 = arith.mulf %27, %30 : vector<1x128xf32>
    %32 = arith.addf %26, %31 : vector<1x128xf32>
    %33 = vector.broadcast %16 : f32 to vector<1x128xf32>
    %34 = arith.divf %32, %33 : vector<1x128xf32>
    %c0_13 = arith.constant 0 : index
    %c0_14 = arith.constant 0 : index
    %35 = vector.load %arg6[%c0_13, %c0_14] : memref<1x128xf32, #tpu.memory_space<vmem>>, vector<1x128xf32>
    tpu.vector_store %arg6[%c0_13, %c0_14], %21 {strides = array<i32>} : memref<1x128xf32, #tpu.memory_space<vmem>>, vector<1x128xf32>,
    %c0_15 = arith.constant 0 : index
    %c0_16 = arith.constant 0 : index
    %36 = vector.load %arg7[%c0_15, %c0_16] : memref<1x128xf32, #tpu.memory_space<vmem>>, vector<1x128xf32>
    tpu.vector_store %arg7[%c0_15, %c0_16], %34 {strides = array<i32>} : memref<1x128xf32, #tpu.memory_space<vmem>>, vector<1x128xf32>,
    %37 = math.sqrt %34 : vector<1x128xf32>
    %cst_17 = arith.constant 9.99999993E-9 : f32
    %38 = vector.broadcast %cst_17 : f32 to vector<1x128xf32>
    %39 = arith.addf %37, %38 : vector<1x128xf32>
    %cst_18 = arith.constant 1.000000e+00 : f32
    %40 = vector.broadcast %cst_18 : f32 to vector<1x128xf32>
    %41 = arith.divf %40, %39 : vector<1x128xf32>
    %42 = vector.broadcast %21 : vector<1x128xf32> to vector<8x128xf32>
    %43 = arith.subf %0, %42 : vector<8x128xf32>
    %44 = vector.broadcast %41 : vector<1x128xf32> to vector<8x128xf32>
    %45 = arith.mulf %43, %44 : vector<8x128xf32>
    %c0_19 = arith.constant 0 : index
    %c0_20 = arith.constant 0 : index
    %46 = vector.load %arg5[%c0_19, %c0_20] : memref<8x128xf32, #tpu.memory_space<vmem>>, vector<8x128xf32>
    tpu.vector_store %arg5[%c0_19, %c0_20], %45 {strides = array<i32>} : memref<8x128xf32, #tpu.memory_space<vmem>>, vector<8x128xf32>,
    return
  }
  func.func @transform_0(%arg0: i32, %arg1: memref<1xi32, #tpu.memory_space<smem>>) -> (i32, i32) {
    %c0_i32 = arith.constant 0 : i32
    %c0_i32_0 = arith.constant 0 : i32
    return %c0_i32, %arg0 : i32, i32
  }
  func.func @transform_1(%arg0: i32, %arg1: memref<1xi32, #tpu.memory_space<smem>>) -> (i32, i32) {
    %c0_i32 = arith.constant 0 : i32
    %c0_i32_0 = arith.constant 0 : i32
    return %c0_i32, %arg0 : i32, i32
  }
  func.func @transform_2(%arg0: i32, %arg1: memref<1xi32, #tpu.memory_space<smem>>) -> (i32, i32) {
    %c0_i32 = arith.constant 0 : i32
    %c0_i32_0 = arith.constant 0 : i32
    return %c0_i32, %arg0 : i32, i32
  }
  func.func @transform_3(%arg0: i32, %arg1: memref<1xi32, #tpu.memory_space<smem>>) -> (i32, i32) {
    %c0_i32 = arith.constant 0 : i32
    %c0_i32_0 = arith.constant 0 : i32
    return %c0_i32, %arg0 : i32, i32
  }
  func.func @transform_4(%arg0: i32, %arg1: memref<1xi32, #tpu.memory_space<smem>>) -> (i32, i32) {
    %c0_i32 = arith.constant 0 : i32
    %c0_i32_0 = arith.constant 0 : i32
    return %c0_i32, %arg0 : i32, i32
  }
  func.func @transform_5(%arg0: i32, %arg1: memref<1xi32, #tpu.memory_space<smem>>) -> (i32, i32) {
    %c0_i32 = arith.constant 0 : i32
    %c0_i32_0 = arith.constant 0 : i32
    return %c0_i32, %arg0 : i32, i32
  }
}

</mosaic_0001>

<llo_original>
// kernel: tpu_custom_call.1
$region0: #{tpu_custom_call.1}
  #allocation0 [shape = 'u32[]', space=smem, size = 0x4, offset = 0x4, fixed_abs, tag = 'smem constant byte address 0x4 - core index']
  #allocation1 [shape = 'u32[144,128]{1,0:T(1,128)}', space=vmem, size = 0x12000, scoped, tag = 'internal scratch']
  #allocation2 [shape = 's32[1]{0}', space=sflag, size = 0x4, scoped, tag = 'scoped memory for tpu_custom_call.1']
  #allocation3 [shape = 's32[1]{0:T(128)S(6)}', space=smem, size = 0x200, scoped, tag = 'prefetched SMEM operand 0']
  %s0 = inlined_call_operand.<no memory space> [shape: s32[1], index: 0, kind: input, shape index: {}]
  %s1 = inlined_call_operand.vmem [shape: f32[1,256], index: 1, kind: input, shape index: {}]
  %s2 = inlined_call_operand.hbm [shape: f32[1,256], index: 2, kind: input, shape index: {}]
  %s3 = inlined_call_operand.hbm [shape: f32[8,256], index: 3, kind: input, shape index: {}]
  %s4 = inlined_call_operand.hbm [shape: f32[8,256], index: 4, kind: output, shape index: {0}]
  %s5 = inlined_call_operand.hbm [shape: f32[1,256], index: 5, kind: output, shape index: {1}]
  %s6 = inlined_call_operand.hbm [shape: f32[1,256], index: 6, kind: output, shape index: {2}]
  %7 = xla_tuple %s4, %s5, %s6
  %s8 = sld [smem:[#allocation0]]
  $region69: #{tpu_custom_call.1} parent=0
    _
  %s10 = ssub.s32 1, %s8
  %s11 = scalar_select 0, %s10, %s8
  %12 = sst [smem:[#allocation3]] %s0
  $region1: #{tpu_custom_call.1} parent=0
    #allocation4 [shape = 'u8[1024]{0}', space=vmem, size = 0x400, scoped, tag = 'input window, operand 2']
    #allocation5 [shape = 's32[2]{0}', space=sflag, size = 0x8, scoped, tag = 'scoped memory for tpu_custom_call.1']
    #allocation6 [shape = 's32[2]{0}', space=sflag, size = 0x8, scoped, tag = 'scoped memory for tpu_custom_call.1']
    #allocation7 [shape = 'u8[8192]{0}', space=vmem, size = 0x2000, scoped, tag = 'input window, operand 3']
    #allocation8 [shape = 's32[2]{0}', space=sflag, size = 0x8, scoped, tag = 'scoped memory for tpu_custom_call.1']
    #allocation9 [shape = 'u8[8192]{0}', space=vmem, size = 0x2000, scoped, tag = 'output window, operand 0']
    #allocation10 [shape = 'u8[1024]{0}', space=vmem, size = 0x400, scoped, tag = 'output window, operand 1']
    #allocation11 [shape = 's32[2]{0}', space=sflag, size = 0x8, scoped, tag = 'scoped memory for tpu_custom_call.1']
    #allocation12 [shape = 'u8[1024]{0}', space=vmem, size = 0x400, scoped, tag = 'output window, operand 2']
    %13 = vsyncpa [#allocation5], 0
    %s14 = scalar_lea.sflag [#allocation5], 1
    %15 = vsyncpa %s14, 0
    %16 = vsyncpa [#allocation8], 0
    %s17 = scalar_lea.sflag [#allocation8], 1
    %18 = vsyncpa %s17, 0
    %19 = vsyncpa [#allocation6], 0
    %s20 = scalar_lea.sflag [#allocation6], 1
    %21 = vsyncpa %s20, 0
    %22 = vsyncpa [#allocation11], 0
    %s23 = scalar_lea.sflag [#allocation11], 1
    %24 = vsyncpa %s23, 0
    loop: start=0, step=1, limit=4
    $region2: #{tpu_custom_call.1} parent=1 // loop_pre_header
      _
    $region3: #{tpu_custom_call.1} parent=1 // loop_header
      %s26 = sphi 0, %s30
      %p27 = scmp.ge.s32.totalorder %s26, 4
      %s36 = sphi 0, %s38
      %s39 = sphi 0, %s36
      %s40 = sphi 0, %s39
      %s56 = sphi 0, %s40
      %s62 = sphi 0, %s64
      %s65 = sphi 0, %s62
      %s66 = sphi 0, %s65
      %s82 = sphi 0, %s66
      %s88 = sphi 0, %s90
      %s91 = sphi 0, %s88
      %s92 = sphi 0, %s91
      %s108 = sphi 0, %s92
      %s114 = sphi 0, %s116
      %s117 = sphi 0, %s114
      %s118 = sphi 0, %s117
      %s134 = sphi 0, %s118
      %s140 = sphi 0, %s142
      %s143 = sphi 0, %s140
      %s144 = sphi 0, %s143
      %s160 = sphi 0, %s144
      %s166 = sphi 0, %s168
      %s169 = sphi 0, %s166
      %s170 = sphi 0, %s169
      %s186 = sphi 0, %s170
    $region4: #{tpu_custom_call.1} parent=1 // loop_header_branch
      %29 = sbr.rel (%p27) target = $region8
    $region5: #{tpu_custom_call.1} parent=1 // loop_body
      %s31 = ssub.s32 %s26, 1
      %s32 = ssub.s32 %s26, 2
      %s33 = sadd.s32 %s26, 1
      %s34 = ssub.s32 %s26, %s33
      %p35 = scmp.eq.s32.totalorder %s34, 0
      %s37 = sadd.s32 %s36, 1
      %s38 = scalar_select %p35, %s36, %s37
      %p41 = pneg %p35
      %p42 = scmp.eq.s32.totalorder %s26, 1
      %p43 = por %p41, %p42
      %p44 = scmp.ne.s32.totalorder %s36, %s39
      %p45 = scmp.eq.s32.totalorder %s26, 0
      %p46 = por %p44, %p45
      %p47 = scmp.ne.s32.totalorder %s36, %s39
      %p48 = scmp.eq.s32.totalorder %s31, 1
      %p49 = por %p47, %p48
      %p50 = scmp.ne.s32.totalorder %s39, %s40
      %p51 = scmp.eq.s32.totalorder %s31, 0
      %p52 = por %p50, %p51
      %p53 = scmp.ne.s32.totalorder %s39, %s40
      %p54 = scmp.eq.s32.totalorder %s32, 1
      %p55 = por %p53, %p54
      %p57 = scmp.ne.s32.totalorder %s40, %s56
      %p58 = scmp.eq.s32.totalorder %s32, 0
      %p59 = por %p57, %p58
      %s60 = ssub.s32 %s26, %s33
      %p61 = scmp.eq.s32.totalorder %s60, 0
      %s63 = sadd.s32 %s62, 1
      %s64 = scalar_select %p61, %s62, %s63
      %p67 = pneg %p61
      %p68 = scmp.eq.s32.totalorder %s26, 1
      %p69 = por %p67, %p68
      %p70 = scmp.ne.s32.totalorder %s62, %s65
      %p71 = scmp.eq.s32.totalorder %s26, 0
      %p72 = por %p70, %p71
      %p73 = scmp.ne.s32.totalorder %s62, %s65
      %p74 = scmp.eq.s32.totalorder %s31, 1
      %p75 = por %p73, %p74
      %p76 = scmp.ne.s32.totalorder %s65, %s66
      %p77 = scmp.eq.s32.totalorder %s31, 0
      %p78 = por %p76, %p77
      %p79 = scmp.ne.s32.totalorder %s65, %s66
      %p80 = scmp.eq.s32.totalorder %s32, 1
      %p81 = por %p79, %p80
      %p83 = scmp.ne.s32.totalorder %s66, %s82
      %p84 = scmp.eq.s32.totalorder %s32, 0
      %p85 = por %p83, %p84
      %s86 = ssub.s32 %s26, %s33
      %p87 = scmp.eq.s32.totalorder %s86, 0
      %s89 = sadd.s32 %s88, 1
      %s90 = scalar_select %p87, %s88, %s89
      %p93 = pneg %p87
      %p94 = scmp.eq.s32.totalorder %s26, 1
      %p95 = por %p93, %p94
      %p96 = scmp.ne.s32.totalorder %s88, %s91
      %p97 = scmp.eq.s32.totalorder %s26, 0
      %p98 = por %p96, %p97
      %p99 = scmp.ne.s32.totalorder %s88, %s91
      %p100 = scmp.eq.s32.totalorder %s31, 1
      %p101 = por %p99, %p100
      %p102 = scmp.ne.s32.totalorder %s91, %s92
      %p103 = scmp.eq.s32.totalorder %s31, 0
      %p104 = por %p102, %p103
      %p105 = scmp.ne.s32.totalorder %s91, %s92
      %p106 = scmp.eq.s32.totalorder %s32, 1
      %p107 = por %p105, %p106
      %p109 = scmp.ne.s32.totalorder %s92, %s108
      %p110 = scmp.eq.s32.totalorder %s32, 0
      %p111 = por %p109, %p110
      %s112 = ssub.s32 %s26, %s33
      %p113 = scmp.eq.s32.totalorder %s112, 0
      %s115 = sadd.s32 %s114, 1
      %s116 = scalar_select %p113, %s114, %s115
      %p119 = pneg %p113
      %p120 = scmp.eq.s32.totalorder %s26, 1
      %p121 = por %p119, %p120
      %p122 = scmp.ne.s32.totalorder %s114, %s117
      %p123 = scmp.eq.s32.totalorder %s26, 0
      %p124 = por %p122, %p123
      %p125 = scmp.ne.s32.totalorder %s114, %s117
      %p126 = scmp.eq.s32.totalorder %s31, 1
      %p127 = por %p125, %p126
      %p128 = scmp.ne.s32.totalorder %s117, %s118
      %p129 = scmp.eq.s32.totalorder %s31, 0
      %p130 = por %p128, %p129
      %p131 = scmp.ne.s32.totalorder %s117, %s118
      %p132 = scmp.eq.s32.totalorder %s32, 1
      %p133 = por %p131, %p132
      %p135 = scmp.ne.s32.totalorder %s118, %s134
      %p136 = scmp.eq.s32.totalorder %s32, 0
      %p137 = por %p135, %p136
      %s138 = ssub.s32 %s26, %s33
      %p139 = scmp.eq.s32.totalorder %s138, 0
      %s141 = sadd.s32 %s140, 1
      %s142 = scalar_select %p139, %s140, %s141
      %p145 = pneg %p139
      %p146 = scmp.eq.s32.totalorder %s26, 1
      %p147 = por %p145, %p146
      %p148 = scmp.ne.s32.totalorder %s140, %s143
      %p149 = scmp.eq.s32.totalorder %s26, 0
      %p150 = por %p148, %p149
      %p151 = scmp.ne.s32.totalorder %s140, %s143
      %p152 = scmp.eq.s32.totalorder %s31, 1
      %p153 = por %p151, %p152
      %p154 = scmp.ne.s32.totalorder %s143, %s144
      %p155 = scmp.eq.s32.totalorder %s31, 0
      %p156 = por %p154, %p155
      %p157 = scmp.ne.s32.totalorder %s143, %s144
      %p158 = scmp.eq.s32.totalorder %s32, 1
      %p159 = por %p157, %p158
      %p161 = scmp.ne.s32.totalorder %s144, %s160
      %p162 = scmp.eq.s32.totalorder %s32, 0
      %p163 = por %p161, %p162
      %s164 = ssub.s32 %s26, %s33
      %p165 = scmp.eq.s32.totalorder %s164, 0
      %s167 = sadd.s32 %s166, 1
      %s168 = scalar_select %p165, %s166, %s167
      %p171 = pneg %p165
      %p172 = scmp.eq.s32.totalorder %s26, 1
      %p173 = por %p171, %p172
      %p174 = scmp.ne.s32.totalorder %s166, %s169
      %p175 = scmp.eq.s32.totalorder %s26, 0
      %p176 = por %p174, %p175
      %p177 = scmp.ne.s32.totalorder %s166, %s169
      %p178 = scmp.eq.s32.totalorder %s31, 1
      %p179 = por %p177, %p178
      %p180 = scmp.ne.s32.totalorder %s169, %s170
      %p181 = scmp.eq.s32.totalorder %s31, 0
      %p182 = por %p180, %p181
      %p183 = scmp.ne.s32.totalorder %s169, %s170
      %p184 = scmp.eq.s32.totalorder %s32, 1
      %p185 = por %p183, %p184
      %p187 = scmp.ne.s32.totalorder %s170, %s186
      %p188 = scmp.eq.s32.totalorder %s32, 0
      %p189 = por %p187, %p188
      %p190 = scmp.le.s32.totalorder 1, %s26
      %p191 = scmp.lt.s32.totalorder %s26, 3
      %p192 = pnand %p190, %p191
      %p193 = pneg %p192
      // Predicated region
      $region9: #{tpu_custom_call.1} parent=5 // pred_check
        _
      $region10: #{tpu_custom_call.1} parent=5 // pred_check_branch
        %195 = sbr.rel (%p192) target = $region12
      $region11: #{tpu_custom_call.1} parent=5 // pred_region
        %s196 = ssub.s32 %s26, 1
      $region12: #{tpu_custom_call.1} parent=5 // pred_fallthru
        _
      %p197 = scmp.lt.s32.totalorder %s26, 2
      // Predicated region
      $region13: #{tpu_custom_call.1} parent=5 // pred_check
        %p198 = pneg %p197
      $region14: #{tpu_custom_call.1} parent=5 // pred_check_branch
        %200 = sbr.rel (%p198) target = $region16
      $region15: #{tpu_custom_call.1} parent=5 // pred_region
        // Predicated region
        $region17: #{tpu_custom_call.1} parent=15 // pred_check
          %p201 = pneg %p46
        $region18: #{tpu_custom_call.1} parent=15 // pred_check_branch
          %203 = sbr.rel (%p201) target = $region20
        $region19: #{tpu_custom_call.1} parent=15 // pred_region
          %p204 = scmp.lt.s32.totalorder %s26, 1
          %s205 = scalar_select %p204, %s26, 1
          %s206 = scalar_lea.vmem %s1, %s205
        $region20: #{tpu_custom_call.1} parent=15 // pred_fallthru
          _
        // Predicated region
        $region21: #{tpu_custom_call.1} parent=15 // pred_check
          %p207 = pneg %p72
        $region22: #{tpu_custom_call.1} parent=15 // pred_check_branch
          %209 = sbr.rel (%p207) target = $region24
        $region23: #{tpu_custom_call.1} parent=15 // pred_region
          %s210 = sand.u32 %s62, 1
          %s211 = scalar_lea.sflag [#allocation5], %s210
          %s212 = sand.u32 %s62, 1
          %s213 = scalar_lea.vmem [#allocation4], %s212
          %s215 = ssub.s32 16, 16
          %216 = vsyncadd %s211, %s215
          %s217 = smul.addr %s26, 16
          %s218 = scalar_lea.hbm %s2, %s217
          %s220 = sshll.u32 %s213, 4
          %s221 = int_to_ptr.vmem [resolvable:$true] %s220
          %223 = dma.hbm_to_vmem [thread:$0]  %s218, 16, %s221, %s211
        $region24: #{tpu_custom_call.1} parent=15 // pred_fallthru
          _
        // Predicated region
        $region25: #{tpu_custom_call.1} parent=15 // pred_check
          %p224 = pneg %p98
        $region26: #{tpu_custom_call.1} parent=15 // pred_check_branch
          %226 = sbr.rel (%p224) target = $region28
        $region27: #{tpu_custom_call.1} parent=15 // pred_region
          %s227 = sand.u32 %s88, 1
          %s228 = scalar_lea.sflag [#allocation8], %s227
          %s229 = sand.u32 %s88, 1
          %s230 = smul.addr %s229, 8
          %s231 = scalar_lea.vmem [#allocation7], %s230
          %s233 = ssub.s32 128, 128
          %234 = vsyncadd %s228, %s233
          %s235 = smul.addr %s26, 128
          %s236 = scalar_lea.hbm %s3, %s235
          %s238 = sshll.u32 %s231, 4
          %s239 = int_to_ptr.vmem [resolvable:$true] %s238
          %241 = dma.hbm_to_vmem [thread:$0]  %s236, 128, %s239, %s228
        $region28: #{tpu_custom_call.1} parent=15 // pred_fallthru
          _
      $region16: #{tpu_custom_call.1} parent=5 // pred_fallthru
        _
      %p242 = scmp.le.s32.totalorder 1, %s26
      %p243 = scmp.lt.s32.totalorder %s26, 3
      %p244 = pnand %p242, %p243
      %p245 = pneg %p244
      // Predicated region
      $region29: #{tpu_custom_call.1} parent=5 // pred_check
        _
      $region30: #{tpu_custom_call.1} parent=5 // pred_check_branch
        %247 = sbr.rel (%p244) target = $region32
      $region31: #{tpu_custom_call.1} parent=5 // pred_region
        %s248 = ssub.s32 %s26, 1
        %s249 = sand.u32 %s65, 1
        %s250 = scalar_lea.sflag [#allocation5], %s249
        %s251 = sand.u32 %s65, 1
        %s252 = scalar_lea.vmem [#allocation4], %s251
        // Predicated region
        $region33: #{tpu_custom_call.1} parent=31 // pred_check
          %p253 = pneg %p78
        $region34: #{tpu_custom_call.1} parent=31 // pred_check_branch
          %255 = sbr.rel (%p253) target = $region36
        $region35: #{tpu_custom_call.1} parent=31 // pred_region
          %256 = dma.done %s250, 16
        $region36: #{tpu_custom_call.1} parent=31 // pred_fallthru
          _
        %s257 = sand.u32 %s91, 1
        %s258 = scalar_lea.sflag [#allocation8], %s257
        %s259 = sand.u32 %s91, 1
        %s260 = smul.addr %s259, 8
        %s261 = scalar_lea.vmem [#allocation7], %s260
        // Predicated region
        $region37: #{tpu_custom_call.1} parent=31 // pred_check
          %p262 = pneg %p104
        $region38: #{tpu_custom_call.1} parent=31 // pred_check_branch
          %264 = sbr.rel (%p262) target = $region40
        $region39: #{tpu_custom_call.1} parent=31 // pred_region
          %265 = dma.done %s258, 128
        $region40: #{tpu_custom_call.1} parent=31 // pred_fallthru
          _
        %p266 = scmp.lt.s32.totalorder %s31, 1
        %s267 = scalar_select %p266, %s31, 1
        %s268 = scalar_lea.vmem %s1, %s267
        %p269 = pneg %p52
        %p270 = pneg %p49
        %s271 = sand.u32 %s65, 1
        %s272 = scalar_lea.sflag [#allocation5], %s271
        %s273 = sand.u32 %s65, 1
        %s274 = scalar_lea.vmem [#allocation4], %s273
        %p275 = pneg %p78
        %p276 = pneg %p75
        %s277 = sand.u32 %s91, 1
        %s278 = scalar_lea.sflag [#allocation8], %s277
        %s279 = sand.u32 %s91, 1
        %s280 = smul.addr %s279, 8
        %s281 = scalar_lea.vmem [#allocation7], %s280
        %p282 = pneg %p104
        %p283 = pneg %p101
        %p284 = pneg %p130
        %p285 = pneg %p127
        %s286 = sand.u32 %s117, 1
        %s287 = scalar_lea.sflag [#allocation6], %s286
        %s288 = sand.u32 %s117, 1
        %s289 = smul.addr %s288, 8
        %s290 = scalar_lea.vmem [#allocation9], %s289
        %p291 = pneg %p156
        %p292 = pneg %p153
        %s293 = sand.u32 %s31, 1
        %s294 = scalar_lea.sflag [#allocation11], %s293
        %s295 = sand.u32 %s143, 1
        %s296 = scalar_lea.vmem [#allocation10], %s295
        %p297 = pneg %p182
        %p298 = pneg %p179
        %s299 = sand.u32 %s31, 1
        %s300 = scalar_lea.sflag [#allocation11], %s299
        %s301 = sand.u32 %s169, 1
        %s302 = scalar_lea.vmem [#allocation12], %s301
        %p303 = scmp.lt.s32.totalorder %s31, 1
        %s304 = scalar_select %p303, %s31, 1
        %s305 = scalar_lea.vmem %s1, %s304
        %v306 = vld [vmem:[%s261] sm:$0xff]
        %v307 = vld [vmem:[%s305] sm:$0x1]
        %v308 = vld [vmem:[%s252] sm:$0x1]
        %s309 = sld [smem:[#allocation3]]
        %s310 = scvt.s32.f32 %s309
        %v311 = vrot.slane %v306, 4
        %v312 = vadd.f32 %v306, %v311
        %v313 = vrot.slane %v312, 2
        %v314 = vadd.f32 %v312, %v313
        %v315 = vrot.slane %v314, 1
        %v316 = vadd.f32 %v314, %v315
        %v317 = vrcp.pop 8.0
        %v318 = vmul.f32 %v316, %v317
        %v319 = vsub.f32 %v306, %v318
        %v320 = vmul.f32 %v319, %v319
        %v321 = vrot.slane %v320, 4
        %v322 = vadd.f32 %v320, %v321
        %v323 = vrot.slane %v322, 2
        %v324 = vadd.f32 %v322, %v323
        %v325 = vrot.slane %v324, 1
        %v326 = vadd.f32 %v324, %v325
        %v327 = vrcp.pop 7.0
        %v328 = vmul.f32 %v326, %v327
        %s329 = sadd.f32 %s310, 8.0
        %v330 = vsub.f32 %v318, %v307
        %v331 = vstv %s329
        %v332 = vrcp.pop %v331
        %s333 = vtos %v332
        %s334 = smul.f32 8.0, %s333
        %v335 = vstv %s334
        %v336 = vmul.f32 %v330, %v335
        %v337 = vadd.f32 %v307, %v336
        %v338 = vstv %s310
        %v339 = vmul.f32 %v308, %v338
        %v340 = vmul.f32 %v328, 8.0
        %v341 = vadd.f32 %v339, %v340
        %v342 = vmul.f32 %v330, %v330
        %s343 = smul.f32 %s310, 8.0
        %v344 = vstv %s329
        %v345 = vrcp.pop %v344
        %s346 = vtos %v345
        %s347 = smul.f32 %s343, %s346
        %v348 = vstv %s347
        %v349 = vmul.f32 %v342, %v348
        %v350 = vadd.f32 %v341, %v349
        %v351 = vstv %s329
        %v352 = vrcp.pop %v351
        %v353 = vmul.f32 %v350, %v352
        %354 = vst [vmem:[%s296] sm:$0x1] %v337
        %355 = vst [vmem:[%s302] sm:$0x1] %v353
        %v356 = vrsqrt.pop %v353
        %v357 = vmul.f32 %v353, %v356
        %vm358 = vcmp.eq.f32.partialorder %v353, inf
        %v359 = vsel %vm358, %v353, %v357
        %vm360 = vcmp.eq.f32.partialorder %v353, 0.0
        %v361 = vand.u32 %v353, 2147483648
        %v362 = vsel %vm360, %v361, %v359
        %v363 = vadd.f32 %v362, 1e-08
        %v364 = vrcp.pop %v363
        %v365 = vmul.f32 1.0, %v364
        %v367 = vlaneseq
        %v368 = vshrl.u32 %v367, 7
        %v369 = vsub.s32 0, %v368
        %v370 = vrot.slane %v337, %v369
        %v372 = vsub.f32 %v306, %v370
        %v374 = vlaneseq
        %v375 = vshrl.u32 %v374, 7
        %v376 = vsub.s32 0, %v375
        %v377 = vrot.slane %v365, %v376
        %v379 = vmul.f32 %v372, %v377
        %380 = vst [vmem:[%s290] sm:$0xff] %v379
        %s381 = sand.u32 %s117, 1
        %s382 = scalar_lea.sflag [#allocation6], %s381
        %s383 = sand.u32 %s117, 1
        %s384 = smul.addr %s383, 8
        %s385 = scalar_lea.vmem [#allocation9], %s384
        %s386 = sand.u32 %s31, 1
        %s387 = scalar_lea.sflag [#allocation11], %s386
        %s388 = sand.u32 %s143, 1
        %s389 = scalar_lea.vmem [#allocation10], %s388
        %s390 = sand.u32 %s31, 1
        %s391 = scalar_lea.sflag [#allocation11], %s390
        %s392 = sand.u32 %s169, 1
        %s393 = scalar_lea.vmem [#allocation12], %s392
        // Predicated region
        $region41: #{tpu_custom_call.1} parent=31 // pred_check
          %p394 = pneg %p127
        $region42: #{tpu_custom_call.1} parent=31 // pred_check_branch
          %396 = sbr.rel (%p394) target = $region44
        $region43: #{tpu_custom_call.1} parent=31 // pred_region
          %s398 = ssub.s32 128, 128
          %399 = vsyncadd %s382, %s398
          %s400 = smul.addr %s31, 128
          %s401 = scalar_lea.hbm %s4, %s400
          %s403 = sshll.u32 %s385, 4
          %s404 = int_to_ptr.vmem [resolvable:$true] %s403
          %406 = dma.vmem_to_hbm [thread:$0]  %s404, 128, %s401, %s382
        $region44: #{tpu_custom_call.1} parent=31 // pred_fallthru
          _
        // Predicated region
        $region45: #{tpu_custom_call.1} parent=31 // pred_check
          %p407 = pneg %p153
        $region46: #{tpu_custom_call.1} parent=31 // pred_check_branch
          %409 = sbr.rel (%p407) target = $region48
        $region47: #{tpu_custom_call.1} parent=31 // pred_region
          %s411 = ssub.s32 16, 16
          %412 = vsyncadd %s387, %s411
          %s413 = smul.addr %s31, 16
          %s414 = scalar_lea.hbm %s5, %s413
          %s416 = sshll.u32 %s389, 4
          %s417 = int_to_ptr.vmem [resolvable:$true] %s416
          %419 = dma.vmem_to_hbm [thread:$0]  %s417, 16, %s414, %s387
        $region48: #{tpu_custom_call.1} parent=31 // pred_fallthru
          _
        // Predicated region
        $region49: #{tpu_custom_call.1} parent=31 // pred_check
          %p420 = pneg %p179
        $region50: #{tpu_custom_call.1} parent=31 // pred_check_branch
          %422 = sbr.rel (%p420) target = $region52
        $region51: #{tpu_custom_call.1} parent=31 // pred_region
          %s424 = ssub.s32 16, 16
          %425 = vsyncadd %s391, %s424
          %s426 = smul.addr %s31, 16
          %s427 = scalar_lea.hbm %s6, %s426
          %s429 = sshll.u32 %s393, 4
          %s430 = int_to_ptr.vmem [resolvable:$true] %s429
          %432 = dma.vmem_to_hbm [thread:$0]  %s430, 16, %s427, %s391
        $region52: #{tpu_custom_call.1} parent=31 // pred_fallthru
          _
      $region32: #{tpu_custom_call.1} parent=5 // pred_fallthru
        _
      %p433 = scmp.le.s32.totalorder 2, %s26
      // Predicated region
      $region53: #{tpu_custom_call.1} parent=5 // pred_check
        %p434 = pneg %p433
      $region54: #{tpu_custom_call.1} parent=5 // pred_check_branch
        %436 = sbr.rel (%p434) target = $region56
      $region55: #{tpu_custom_call.1} parent=5 // pred_region
        %s437 = ssub.s32 %s26, 2
        // Predicated region
        $region57: #{tpu_custom_call.1} parent=55 // pred_check
          %p438 = pneg %p133
        $region58: #{tpu_custom_call.1} parent=55 // pred_check_branch
          %440 = sbr.rel (%p438) target = $region60
        $region59: #{tpu_custom_call.1} parent=55 // pred_region
          %s441 = sand.u32 %s118, 1
          %s442 = scalar_lea.sflag [#allocation6], %s441
          %s443 = sand.u32 %s118, 1
          %s444 = smul.addr %s443, 8
          %s445 = scalar_lea.vmem [#allocation9], %s444
          %446 = dma.done %s442, 128
        $region60: #{tpu_custom_call.1} parent=55 // pred_fallthru
          _
        // Predicated region
        $region61: #{tpu_custom_call.1} parent=55 // pred_check
          %p447 = pneg %p159
        $region62: #{tpu_custom_call.1} parent=55 // pred_check_branch
          %449 = sbr.rel (%p447) target = $region64
        $region63: #{tpu_custom_call.1} parent=55 // pred_region
          %s450 = sand.u32 %s32, 1
          %s451 = scalar_lea.sflag [#allocation11], %s450
          %s452 = sand.u32 %s144, 1
          %s453 = scalar_lea.vmem [#allocation10], %s452
          %454 = dma.done %s451, 16
        $region64: #{tpu_custom_call.1} parent=55 // pred_fallthru
          _
        // Predicated region
        $region65: #{tpu_custom_call.1} parent=55 // pred_check
          %p455 = pneg %p185
        $region66: #{tpu_custom_call.1} parent=55 // pred_check_branch
          %457 = sbr.rel (%p455) target = $region68
        $region67: #{tpu_custom_call.1} parent=55 // pred_region
          %s458 = sand.u32 %s32, 1
          %s459 = scalar_lea.sflag [#allocation11], %s458
          %s460 = sand.u32 %s170, 1
          %s461 = scalar_lea.vmem [#allocation12], %s460
          %462 = dma.done %s459, 16
        $region68: #{tpu_custom_call.1} parent=55 // pred_fallthru
          _
      $region56: #{tpu_custom_call.1} parent=5 // pred_fallthru
        _
    $region6: #{tpu_custom_call.1} parent=1 // loop_footer
      %s30 = sadd.s32 1, %s26
    $region7: #{tpu_custom_call.1} parent=1 // loop_footer_branch
      %25 = sbr.rel target = $region3
    $region8: #{tpu_custom_call.1} parent=1 // loop_exit
      _
    %463 = vsyncpa [#allocation5], 1
    %s464 = scalar_lea.sflag [#allocation5], 1
    %465 = vsyncpa %s464, 1
    %466 = vsyncpa [#allocation8], 1
    %s467 = scalar_lea.sflag [#allocation8], 1
    %468 = vsyncpa %s467, 1
    %469 = vsyncpa [#allocation6], 1
    %s470 = scalar_lea.sflag [#allocation6], 1
    %471 = vsyncpa %s470, 1
    %472 = vsyncpa [#allocation11], 1
    %s473 = scalar_lea.sflag [#allocation11], 1
    %474 = vsyncpa %s473, 1

</llo_original>
